<compile_context>
chip_gen: v7x
topology: tpu7x:2x2x1
jax: 0.10.0
libtpu: 0.0.40
codegen_flags: <defaults>
</compile_context>

<pallas_src>
import math

import jax
import jax.numpy as jnp
from jax.experimental import pallas as pl
from jax.experimental.pallas import tpu as pltpu

INPUT_DIM = 2
LAYER1 = 2
LAYER2 = 4
# Flat parameter layout in SMEM:
#   [0:4)   w1 (row-major [in=2, out=2])
#   [4:6)   b1
#   [6:14)  w2 (row-major [in=2, out=4])
#   [14:18) b2
_W1_OFF = 0
_B1_OFF = _W1_OFF + INPUT_DIM * LAYER1
_W2_OFF = _B1_OFF + LAYER1
_B2_OFF = _W2_OFF + LAYER1 * LAYER2
_NPARAMS = _B2_OFF + LAYER2


def _round_up(n, m):
    return ((n + m - 1) // m) * m


def _block_kernel(p_ref, x_ref, o_ref):
    # p_ref: SMEM [18] flat params (scalar reads, no vector traffic)
    # x_ref: VMEM [INPUT_DIM, TB]  (features on sublanes, batch on lanes)
    # o_ref: VMEM [LAYER2, TB]
    x = x_ref[...]                       # [2, TB] f32
    x0 = x[0:1, :]                       # [1, TB]
    x1 = x[1:2, :]                       # [1, TB]

    def w1(i, j):
        return p_ref[_W1_OFF + i * LAYER1 + j]

    def w2(i, j):
        return p_ref[_W2_OFF + i * LAYER2 + j]

    # Layer 1: 2 -> 2, unrolled VPU FMAs with scalar weights from SMEM + ReLU.
    h0 = jnp.maximum(x0 * w1(0, 0) + x1 * w1(1, 0) + p_ref[_B1_OFF + 0], 0.0)
    h1 = jnp.maximum(x0 * w1(0, 1) + x1 * w1(1, 1) + p_ref[_B1_OFF + 1], 0.0)

    # Layer 2: 2 -> 4, unrolled VPU FMAs + ReLU.
    ys = []
    for j in range(LAYER2):
        ys.append(
            jnp.maximum(h0 * w2(0, j) + h1 * w2(1, j) + p_ref[_B2_OFF + j], 0.0)
        )

    # Single lane-dense store of the whole [4, TB] tile (unmasked vst).
    o_ref[...] = jnp.concatenate(ys, axis=0).astype(o_ref.dtype)


def block_forward(x, w1, b1, w2, b2, *, tb=32768):
    """x: [B, INPUT_DIM] f32 -> [B, LAYER2] f32.

    w1: [INPUT_DIM, LAYER1], b1: [LAYER1], w2: [LAYER1, LAYER2], b2: [LAYER2]
    (weights stored [in, out], i.e. transposed relative to torch's [out, in]).
    """
    B = x.shape[0]
    # Lane tile: multiple of 128, capped at `tb`.
    TB = min(tb, _round_up(B, 128))
    B_pad = _round_up(B, TB)

    xT = jnp.pad(x.T.astype(jnp.float32), ((0, 0), (0, B_pad - B)))  # [2, B_pad]

    params = jnp.concatenate(
        [
            w1.reshape(-1).astype(jnp.float32),
            b1.reshape(-1).astype(jnp.float32),
            w2.reshape(-1).astype(jnp.float32),
            b2.reshape(-1).astype(jnp.float32),
        ]
    )
    assert params.shape[0] == _NPARAMS

    out_T = pl.pallas_call(
        _block_kernel,
        out_shape=jax.ShapeDtypeStruct((LAYER2, B_pad), jnp.float32),
        grid=(B_pad // TB,),
        in_specs=[
            pl.BlockSpec(memory_space=pltpu.MemorySpace.SMEM),   # flat params
            pl.BlockSpec((INPUT_DIM, TB), lambda i: (0, i)),     # xT tile
        ],
        out_specs=pl.BlockSpec((LAYER2, TB), lambda i: (0, i)),
        compiler_params=pltpu.CompilerParams(
            dimension_semantics=("parallel",)),
    )(params, xT)

    return out_T[:, :B].T                                        # [B, LAYER2]


def init_params(key):
    """Deterministic init mimicking torch.nn.Linear U(-1/sqrt(fan_in), 1/sqrt(fan_in))."""
    k1, k2, k3, k4 = jax.random.split(key, 4)
    bound1 = 1.0 / math.sqrt(INPUT_DIM)
    bound2 = 1.0 / math.sqrt(LAYER1)
    w1 = jax.random.uniform(k1, (INPUT_DIM, LAYER1), jnp.float32, -bound1, bound1)
    b1 = jax.random.uniform(k2, (LAYER1,), jnp.float32, -bound1, bound1)
    w2 = jax.random.uniform(k3, (LAYER1, LAYER2), jnp.float32, -bound2, bound2)
    b2 = jax.random.uniform(k4, (LAYER2,), jnp.float32, -bound2, bound2)
    return w1, b1, w2, b2


def block_reference(x, w1, b1, w2, b2):
    h = jnp.maximum(x @ w1 + b1[None, :], 0.0)
    return jnp.maximum(h @ w2 + b2[None, :], 0.0)


if __name__ == "__main__":
    key = jax.random.PRNGKey(0)
    kx, kp = jax.random.split(key)
    w1, b1, w2, b2 = init_params(kp)

    # Small-shape check consistent with the module (Linear(2 -> 2 -> 4)).
    batch = 8
    x = jax.random.normal(kx, (batch, INPUT_DIM), jnp.float32)
    out = jax.block_until_ready(block_forward(x, w1, b1, w2, b2))
    ref = block_reference(x, w1, b1, w2, b2)
    assert out.shape == (batch, LAYER2)
    assert jnp.allclose(out, ref, atol=1e-5, rtol=1e-5)

    # Second check exercising a multi-step grid (padding + >1 tile).
    x2 = jax.random.normal(kx, (1000, INPUT_DIM), jnp.float32)
    out2 = jax.block_until_ready(block_forward(x2, w1, b1, w2, b2, tb=256))
    ref2 = block_reference(x2, w1, b1, w2, b2)
    assert out2.shape == (1000, LAYER2)
    assert jnp.allclose(out2, ref2, atol=1e-5, rtol=1e-5)

    print("KERNEL_OK")
</pallas_src>

<mosaic_0001>
module attributes {stable_mosaic.version = 11 : i64} {
  func.func @_block_kernel(%arg0: i32, %arg1: memref<18xf32, #tpu.memory_space<smem>>, %arg2: memref<2x128xf32, #tpu.memory_space<vmem>>, %arg3: memref<4x128xf32, #tpu.memory_space<vmem>>) attributes {dimension_semantics = [#tpu.dimension_semantics<parallel>], iteration_bounds = array<i64: 1>, scalar_prefetch = 0 : i64, scratch_operands = 0 : i64, tpu.core_type = #tpu.core_type<tc>, window_params = [{transform_indices = @transform_0, window_bounds = array<i64: 18>}, {transform_indices = @transform_1, window_bounds = array<i64: 2, 128>}, {transform_indices = @transform_2, window_bounds = array<i64: 4, 128>}]} {
    %c0 = arith.constant 0 : index
    %c0_0 = arith.constant 0 : index
    %0 = vector.load %arg2[%c0, %c0_0] : memref<2x128xf32, #tpu.memory_space<vmem>>, vector<2x128xf32>
    %1 = vector.extract_strided_slice %0 {offsets = [0, 0], sizes = [1, 128], strides = [1, 1]} : vector<2x128xf32> to vector<1x128xf32>
    %2 = vector.extract_strided_slice %0 {offsets = [1, 0], sizes = [1, 128], strides = [1, 1]} : vector<2x128xf32> to vector<1x128xf32>
    %c0_1 = arith.constant 0 : index
    %3 = memref.load %arg1[%c0_1] : memref<18xf32, #tpu.memory_space<smem>>
    %4 = vector.broadcast %3 : f32 to vector<1x128xf32>
    %5 = arith.mulf %1, %4 : vector<1x128xf32>
    %c2 = arith.constant 2 : index
    %6 = memref.load %arg1[%c2] : memref<18xf32, #tpu.memory_space<smem>>
    %7 = vector.broadcast %6 : f32 to vector<1x128xf32>
    %8 = arith.mulf %2, %7 : vector<1x128xf32>
    %9 = arith.addf %5, %8 : vector<1x128xf32>
    %c4 = arith.constant 4 : index
    %10 = memref.load %arg1[%c4] : memref<18xf32, #tpu.memory_space<smem>>
    %11 = vector.broadcast %10 : f32 to vector<1x128xf32>
    %12 = arith.addf %9, %11 : vector<1x128xf32>
    %cst = arith.constant 0.000000e+00 : f32
    %13 = vector.broadcast %cst : f32 to vector<1x128xf32>
    %14 = arith.maximumf %12, %13 : vector<1x128xf32>
    %c1 = arith.constant 1 : index
    %15 = memref.load %arg1[%c1] : memref<18xf32, #tpu.memory_space<smem>>
    %16 = vector.broadcast %15 : f32 to vector<1x128xf32>
    %17 = arith.mulf %1, %16 : vector<1x128xf32>
    %c3 = arith.constant 3 : index
    %18 = memref.load %arg1[%c3] : memref<18xf32, #tpu.memory_space<smem>>
    %19 = vector.broadcast %18 : f32 to vector<1x128xf32>
    %20 = arith.mulf %2, %19 : vector<1x128xf32>
    %21 = arith.addf %17, %20 : vector<1x128xf32>
    %c5 = arith.constant 5 : index
    %22 = memref.load %arg1[%c5] : memref<18xf32, #tpu.memory_space<smem>>
    %23 = vector.broadcast %22 : f32 to vector<1x128xf32>
    %24 = arith.addf %21, %23 : vector<1x128xf32>
    %cst_2 = arith.constant 0.000000e+00 : f32
    %25 = vector.broadcast %cst_2 : f32 to vector<1x128xf32>
    %26 = arith.maximumf %24, %25 : vector<1x128xf32>
    %c6 = arith.constant 6 : index
    %27 = memref.load %arg1[%c6] : memref<18xf32, #tpu.memory_space<smem>>
    %28 = vector.broadcast %27 : f32 to vector<1x128xf32>
    %29 = arith.mulf %14, %28 : vector<1x128xf32>
    %c10 = arith.constant 10 : index
    %30 = memref.load %arg1[%c10] : memref<18xf32, #tpu.memory_space<smem>>
    %31 = vector.broadcast %30 : f32 to vector<1x128xf32>
    %32 = arith.mulf %26, %31 : vector<1x128xf32>
    %33 = arith.addf %29, %32 : vector<1x128xf32>
    %c14 = arith.constant 14 : index
    %34 = memref.load %arg1[%c14] : memref<18xf32, #tpu.memory_space<smem>>
    %35 = vector.broadcast %34 : f32 to vector<1x128xf32>
    %36 = arith.addf %33, %35 : vector<1x128xf32>
    %cst_3 = arith.constant 0.000000e+00 : f32
    %37 = vector.broadcast %cst_3 : f32 to vector<1x128xf32>
    %38 = arith.maximumf %36, %37 : vector<1x128xf32>
    %c7 = arith.constant 7 : index
    %39 = memref.load %arg1[%c7] : memref<18xf32, #tpu.memory_space<smem>>
    %40 = vector.broadcast %39 : f32 to vector<1x128xf32>
    %41 = arith.mulf %14, %40 : vector<1x128xf32>
    %c11 = arith.constant 11 : index
    %42 = memref.load %arg1[%c11] : memref<18xf32, #tpu.memory_space<smem>>
    %43 = vector.broadcast %42 : f32 to vector<1x128xf32>
    %44 = arith.mulf %26, %43 : vector<1x128xf32>
    %45 = arith.addf %41, %44 : vector<1x128xf32>
    %c15 = arith.constant 15 : index
    %46 = memref.load %arg1[%c15] : memref<18xf32, #tpu.memory_space<smem>>
    %47 = vector.broadcast %46 : f32 to vector<1x128xf32>
    %48 = arith.addf %45, %47 : vector<1x128xf32>
    %cst_4 = arith.constant 0.000000e+00 : f32
    %49 = vector.broadcast %cst_4 : f32 to vector<1x128xf32>
    %50 = arith.maximumf %48, %49 : vector<1x128xf32>
    %c8 = arith.constant 8 : index
    %51 = memref.load %arg1[%c8] : memref<18xf32, #tpu.memory_space<smem>>
    %52 = vector.broadcast %51 : f32 to vector<1x128xf32>
    %53 = arith.mulf %14, %52 : vector<1x128xf32>
    %c12 = arith.constant 12 : index
    %54 = memref.load %arg1[%c12] : memref<18xf32, #tpu.memory_space<smem>>
    %55 = vector.broadcast %54 : f32 to vector<1x128xf32>
    %56 = arith.mulf %26, %55 : vector<1x128xf32>
    %57 = arith.addf %53, %56 : vector<1x128xf32>
    %c16 = arith.constant 16 : index
    %58 = memref.load %arg1[%c16] : memref<18xf32, #tpu.memory_space<smem>>
    %59 = vector.broadcast %58 : f32 to vector<1x128xf32>
    %60 = arith.addf %57, %59 : vector<1x128xf32>
    %cst_5 = arith.constant 0.000000e+00 : f32
    %61 = vector.broadcast %cst_5 : f32 to vector<1x128xf32>
    %62 = arith.maximumf %60, %61 : vector<1x128xf32>
    %c9 = arith.constant 9 : index
    %63 = memref.load %arg1[%c9] : memref<18xf32, #tpu.memory_space<smem>>
    %64 = vector.broadcast %63 : f32 to vector<1x128xf32>
    %65 = arith.mulf %14, %64 : vector<1x128xf32>
    %c13 = arith.constant 13 : index
    %66 = memref.load %arg1[%c13] : memref<18xf32, #tpu.memory_space<smem>>
    %67 = vector.broadcast %66 : f32 to vector<1x128xf32>
    %68 = arith.mulf %26, %67 : vector<1x128xf32>
    %69 = arith.addf %65, %68 : vector<1x128xf32>
    %c17 = arith.constant 17 : index
    %70 = memref.load %arg1[%c17] : memref<18xf32, #tpu.memory_space<smem>>
    %71 = vector.broadcast %70 : f32 to vector<1x128xf32>
    %72 = arith.addf %69, %71 : vector<1x128xf32>
    %cst_6 = arith.constant 0.000000e+00 : f32
    %73 = vector.broadcast %cst_6 : f32 to vector<1x128xf32>
    %74 = arith.maximumf %72, %73 : vector<1x128xf32>
    %75 = tpu.concatenate %38, %50, %62, %74 in 0 : vector<1x128xf32>, vector<1x128xf32>, vector<1x128xf32>, vector<1x128xf32> -> vector<4x128xf32>
    %c0_7 = arith.constant 0 : index
    %c0_8 = arith.constant 0 : index
    %76 = vector.load %arg3[%c0_7, %c0_8] : memref<4x128xf32, #tpu.memory_space<vmem>>, vector<4x128xf32>
    tpu.vector_store %arg3[%c0_7, %c0_8], %75 {strides = array<i32>} : memref<4x128xf32, #tpu.memory_space<vmem>>, vector<4x128xf32>,
    return
  }
  func.func @transform_0(%arg0: i32) -> i32 {
    %c0_i32 = arith.constant 0 : i32
    %c0_i32_0 = arith.constant 0 : i32
    return %c0_i32 : i32
  }
  func.func @transform_1(%arg0: i32) -> (i32, i32) {
    %c0_i32 = arith.constant 0 : i32
    %c0_i32_0 = arith.constant 0 : i32
    return %c0_i32, %arg0 : i32, i32
  }
  func.func @transform_2(%arg0: i32) -> (i32, i32) {
    %c0_i32 = arith.constant 0 : i32
    %c0_i32_0 = arith.constant 0 : i32
    return %c0_i32, %arg0 : i32, i32
  }
}

</mosaic_0001>

<llo_original>
// kernel: tpu_custom_call.1
$region0: #{tpu_custom_call.1}
  #allocation0 [shape = 'u32[]', space=smem, size = 0x4, offset = 0x4, fixed_abs, tag = 'smem constant byte address 0x4 - core index']
  #allocation1 [shape = 'u32[144,128]{1,0:T(1,128)}', space=vmem, size = 0x12000, scoped, tag = 'internal scratch']
  %s0 = inlined_call_operand.hbm [shape: f32[18], index: 0, kind: input, shape index: {}]
  %s1 = inlined_call_operand.vmem [shape: f32[2,128], index: 1, kind: input, shape index: {}]
  %s2 = inlined_call_operand.hbm [shape: f32[4,128], index: 2, kind: output, shape index: {}]
  %s3 = sld [smem:[#allocation0]]
  $region22: #{tpu_custom_call.1} parent=0
    _
  %s5 = ssub.s32 1, %s3
  %s6 = scalar_select 0, %s5, %s3
  $region1: #{tpu_custom_call.1} parent=0
    #allocation2 [shape = 'u8[512]{0}', space=smem, size = 0x200, scoped, tag = 'input window, operand 0, single buffered']
    #allocation3 [shape = 's32[1]{0}', space=sflag, size = 0x4, scoped, tag = 'scoped memory for tpu_custom_call.1']
    #allocation4 [shape = 's32[1]{0}', space=sflag, size = 0x4, scoped, tag = 'scoped memory for tpu_custom_call.1']
    #allocation5 [shape = 'u8[2048]{0}', space=vmem, size = 0x800, scoped, tag = 'output window, operand 0, single buffered']
    %7 = vsyncpa [#allocation4], 0
    %8 = vsyncpa [#allocation3], 0
    // Predicated region
    $region2: #{tpu_custom_call.1} parent=1 // pred_check
      _
    $region3: #{tpu_custom_call.1} parent=1 // pred_check_branch
      %10 = sbr.rel (0) target = $region5
    $region4: #{tpu_custom_call.1} parent=1 // pred_region
      %s12 = ssub.s32 16, 16
      %13 = vsyncadd [#allocation4], %s12
      %16 = dma.hbm_to_smem %s0, 16, [#allocation2], [#allocation4]
    $region5: #{tpu_custom_call.1} parent=1 // pred_fallthru
      _
    // Predicated region
    $region6: #{tpu_custom_call.1} parent=1 // pred_check
      _
    $region7: #{tpu_custom_call.1} parent=1 // pred_check_branch
      %18 = sbr.rel (0) target = $region9
    $region8: #{tpu_custom_call.1} parent=1 // pred_region
      _
    $region9: #{tpu_custom_call.1} parent=1 // pred_fallthru
      _
    // Predicated region
    $region10: #{tpu_custom_call.1} parent=1 // pred_check
      _
    $region11: #{tpu_custom_call.1} parent=1 // pred_check_branch
      %20 = sbr.rel (0) target = $region13
    $region12: #{tpu_custom_call.1} parent=1 // pred_region
      %21 = dma.done [#allocation4], 16
    $region13: #{tpu_custom_call.1} parent=1 // pred_fallthru
      _
    %22 = sfence
    %v23 = vld [vmem:[%s1] sm:$0x3]
    %s24 = sld [smem:[#allocation2]]
    %v25 = vstv %s24
    %v26 = vmul.f32 %v23, %v25
    %s27 = sld [smem:[#allocation2 + $0x2]]
    %v28 = vstv %s27
    %v29 = vmul.f32 %v23, %v28
    %v31 = vrot.slane %v29, 1
    %v33 = vadd.f32 %v26, %v31
    %s34 = sld [smem:[#allocation2 + $0x4]]
    %v35 = vstv %s34
    %v36 = vadd.f32 %v33, %v35
    %v37 = vmax.f32 %v36, 0.0
    %s38 = sld [smem:[#allocation2 + $0x1]]
    %v39 = vstv %s38
    %v40 = vmul.f32 %v23, %v39
    %s41 = sld [smem:[#allocation2 + $0x3]]
    %v42 = vstv %s41
    %v43 = vmul.f32 %v23, %v42
    %v45 = vrot.slane %v43, 1
    %v47 = vadd.f32 %v40, %v45
    %s48 = sld [smem:[#allocation2 + $0x5]]
    %v49 = vstv %s48
    %v50 = vadd.f32 %v47, %v49
    %v51 = vmax.f32 %v50, 0.0
    %s52 = sld [smem:[#allocation2 + $0x6]]
    %v53 = vstv %s52
    %v54 = vmul.f32 %v37, %v53
    %s55 = sld [smem:[#allocation2 + $0xa]]
    %v56 = vstv %s55
    %v57 = vmul.f32 %v51, %v56
    %v58 = vadd.f32 %v54, %v57
    %s59 = sld [smem:[#allocation2 + $0xe]]
    %v60 = vstv %s59
    %v61 = vadd.f32 %v58, %v60
    %v62 = vmax.f32 %v61, 0.0
    %s63 = sld [smem:[#allocation2 + $0x7]]
    %v64 = vstv %s63
    %v65 = vmul.f32 %v37, %v64
    %s66 = sld [smem:[#allocation2 + $0xb]]
    %v67 = vstv %s66
    %v68 = vmul.f32 %v51, %v67
    %v69 = vadd.f32 %v65, %v68
    %s70 = sld [smem:[#allocation2 + $0xf]]
    %v71 = vstv %s70
    %v72 = vadd.f32 %v69, %v71
    %v73 = vmax.f32 %v72, 0.0
    %s74 = sld [smem:[#allocation2 + $0x8]]
    %v75 = vstv %s74
    %v76 = vmul.f32 %v37, %v75
    %s77 = sld [smem:[#allocation2 + $0xc]]
    %v78 = vstv %s77
    %v79 = vmul.f32 %v51, %v78
    %v80 = vadd.f32 %v76, %v79
    %s81 = sld [smem:[#allocation2 + $0x10]]
    %v82 = vstv %s81
    %v83 = vadd.f32 %v80, %v82
    %v84 = vmax.f32 %v83, 0.0
    %s85 = sld [smem:[#allocation2 + $0x9]]
    %v86 = vstv %s85
    %v87 = vmul.f32 %v37, %v86
    %s88 = sld [smem:[#allocation2 + $0xd]]
    %v89 = vstv %s88
    %v90 = vmul.f32 %v51, %v89
    %v91 = vadd.f32 %v87, %v90
    %s92 = sld [smem:[#allocation2 + $0x11]]
    %v93 = vstv %s92
    %v94 = vadd.f32 %v91, %v93
    %v95 = vmax.f32 %v94, 0.0
    %v97 = vrot.slane %v73, 7
    %v100 = vrot.slane %v84, 6
    %v103 = vrot.slane %v95, 5
    %vm105 = vcmask 1040384
    %v106 = vsel %vm105, %v62, %v97
    %vm107 = vcmask 1041408
    %v108 = vsel %vm107, %v106, %v100
    %vm109 = vcmask 1042432
    %v110 = vsel %vm109, %v108, %v103
    %111 = vst [vmem:[#allocation5] sm:$0xf] %v110
    // Predicated region
    $region14: #{tpu_custom_call.1} parent=1 // pred_check
      _
    $region15: #{tpu_custom_call.1} parent=1 // pred_check_branch
      %113 = sbr.rel (0) target = $region17
    $region16: #{tpu_custom_call.1} parent=1 // pred_region
      %s115 = ssub.s32 64, 64
      %116 = vsyncadd [#allocation3], %s115
      %s118 = sshll.u32 [#allocation5], 4
      %s119 = int_to_ptr.vmem [resolvable:$true] %s118
      %121 = dma.vmem_to_hbm [thread:$0]  %s119, 64, %s2, [#allocation3]
    $region17: #{tpu_custom_call.1} parent=1 // pred_fallthru
      _
    // Predicated region
    $region18: #{tpu_custom_call.1} parent=1 // pred_check
      _
    $region19: #{tpu_custom_call.1} parent=1 // pred_check_branch
      %123 = sbr.rel (0) target = $region21
    $region20: #{tpu_custom_call.1} parent=1 // pred_region
      %124 = dma.done [#allocation3], 64
    $region21: #{tpu_custom_call.1} parent=1 // pred_fallthru
      _
    %125 = vsyncpa [#allocation3], 1
    %126 = vsyncpa [#allocation4], 1

</llo_original>
